<compile_context>
chip_gen: v7x
topology: tpu7x:2x2x1
jax: 0.10.0
libtpu: 0.0.40
codegen_flags: <defaults>
</compile_context>

<pallas_src>
import jax
import jax.numpy as jnp
from jax.experimental import pallas as pl
from jax.experimental.pallas import tpu as pltpu


def mlp_readout_softmax_kernel(h_ref, w1_ref, b1_ref, w2_ref, b2_ref,
                               w3_ref, b3_ref, o_ref):
    # MLPReadout with L=2: two (Linear + ReLU), final Linear, then softmax(dim=1).
    y = h_ref[...]  # bf16 or f32; dot promotes, accumulates in f32

    y = jnp.dot(y, w1_ref[...], preferred_element_type=jnp.float32) + b1_ref[...]
    y = jnp.maximum(y, 0.0)

    y = jnp.dot(y, w2_ref[...], preferred_element_type=jnp.float32) + b2_ref[...]
    y = jnp.maximum(y, 0.0)

    logits = jnp.dot(y, w3_ref[...], preferred_element_type=jnp.float32) + b3_ref[...]

    # Numerically-stable row softmax with exact normalization: row sums must be 1 to
    # f32 precision (consumers may take log(probs)).  Kernel is memory-bound, so the
    # exact divide costs nothing on the critical path.
    m = jnp.max(logits, axis=1, keepdims=True)
    e = jnp.exp(logits - m)
    denom = jnp.sum(e, axis=1, keepdims=True)
    o_ref[...] = (e / denom).astype(o_ref.dtype)


def _round_up(x, m):
    return ((x + m - 1) // m) * m


def _choose_tm(n_rows, cap=512):
    # Multiple of 8 sublanes; target >= 4 grid steps for large N so the v7x megacore
    # gets both TensorCores busy and the row stream double-buffers.  Cap 512: already
    # ~85% of HBM roofline and keeps per-step f32 temporaries small.
    return max(8, min(cap, _round_up(pl.cdiv(n_rows, 4), 8)))


def transformer_cluster_readout(h, params, tm=None):
    """h: [N, out_dim] features from the (frozen) backbone, f32 or bf16.
    params: MLPReadout weights stored as [in, out] (transposed vs. PyTorch)
    plus [1, out] biases."""
    w1, b1, w2, b2, w3, b3 = params
    N, D = h.shape
    n_classes = w3.shape[1]

    TM = _choose_tm(N) if tm is None else tm
    grid = (pl.cdiv(N, TM),)  # ragged last tile handled by Pallas; no jnp.pad copy

    row_spec = pl.BlockSpec((TM, D), lambda i: (i, 0))
    # Narrow output block: equals the full last dim (n_classes) -> legal; masked store,
    # but write traffic drops to n_classes*4 B/row and no post-call slice pass.
    out_spec = pl.BlockSpec((TM, n_classes), lambda i: (i, 0))

    def const_spec(a):
        # Full-array block, constant index_map -> DMA'd once, VMEM-resident across tiles.
        return pl.BlockSpec(a.shape, lambda i: (0, 0))

    return pl.pallas_call(
        mlp_readout_softmax_kernel,
        out_shape=jax.ShapeDtypeStruct((N, n_classes), jnp.float32),
        grid=grid,
        in_specs=[row_spec,
                  const_spec(w1), const_spec(b1),
                  const_spec(w2), const_spec(b2),
                  const_spec(w3), const_spec(b3)],
        out_specs=out_spec,
        compiler_params=pltpu.CompilerParams(
            dimension_semantics=("parallel",)),
    )(h, w1, b1, w2, b2, w3, b3)


def init_mlp_readout_params(key, input_dim, output_dim, L=2):
    """Deterministic init mimicking nn.Linear default (uniform +/- 1/sqrt(fan_in)).
    Weights are stored as [in, out] (transposed vs. PyTorch)."""
    params = []
    dims = [input_dim // (2 ** l) for l in range(L + 1)] + [output_dim]
    for l in range(L + 1):
        d_in, d_out = dims[l], dims[l + 1]
        key, kw, kb = jax.random.split(key, 3)
        bound = 1.0 / (d_in ** 0.5)
        w = jax.random.uniform(kw, (d_in, d_out), jnp.float32, -bound, bound)
        b = jax.random.uniform(kb, (1, d_out), jnp.float32, -bound, bound)
        params += [w, b]
    return tuple(params)


if __name__ == "__main__":
    key = jax.random.PRNGKey(0)

    # Small shapes consistent with the module: out_dim (backbone feature dim) = 32,
    # n_classes = 4, batch of N = 8 feature rows.
    N, out_dim, n_classes = 8, 32, 4

    key, kh, kp = jax.random.split(key, 3)
    # Backbone features, streamed in bf16 (halves the dominant HBM read of this
    # memory-bound kernel); the MLP + softmax itself computes in f32.
    h = jax.random.normal(kh, (N, out_dim), jnp.float32).astype(jnp.bfloat16)
    params = init_mlp_readout_params(kp, out_dim, n_classes, L=2)  # MLPReadout weights

    out = transformer_cluster_readout(h, params)
    out = jax.block_until_ready(out)

    # Pure-JAX reference on the same bf16 features (f32 compute).
    w1, b1, w2, b2, w3, b3 = params
    hf = h.astype(jnp.float32)
    y = jnp.maximum(jnp.dot(hf, w1, preferred_element_type=jnp.float32) + b1, 0.0)
    y = jnp.maximum(jnp.dot(y, w2, preferred_element_type=jnp.float32) + b2, 0.0)
    ref = jax.nn.softmax(jnp.dot(y, w3, preferred_element_type=jnp.float32) + b3, axis=1)

    assert out.shape == (N, n_classes)
    assert jnp.allclose(out, ref, atol=2e-3, rtol=2e-3)
    assert jnp.allclose(jnp.sum(out, axis=1), jnp.ones((N,)), atol=1e-3)

    print("KERNEL_OK")
</pallas_src>

<mosaic_0001>
module attributes {stable_mosaic.version = 11 : i64} {
  func.func @mlp_readout_softmax_kernel(%arg0: i32, %arg1: memref<8x32xbf16, #tpu.memory_space<vmem>>, %arg2: memref<32x16xf32, #tpu.memory_space<vmem>>, %arg3: memref<1x16xf32, #tpu.memory_space<vmem>>, %arg4: memref<16x8xf32, #tpu.memory_space<vmem>>, %arg5: memref<1x8xf32, #tpu.memory_space<vmem>>, %arg6: memref<8x4xf32, #tpu.memory_space<vmem>>, %arg7: memref<1x4xf32, #tpu.memory_space<vmem>>, %arg8: memref<8x4xf32, #tpu.memory_space<vmem>>) attributes {dimension_semantics = [#tpu.dimension_semantics<parallel>], iteration_bounds = array<i64: 1>, scalar_prefetch = 0 : i64, scratch_operands = 0 : i64, tpu.core_type = #tpu.core_type<tc>, window_params = [{transform_indices = @transform_0, window_bounds = array<i64: 8, 32>}, {pipeline_mode = #tpu.pipeline_mode<synchronous>, transform_indices = @transform_1, window_bounds = array<i64: 32, 16>}, {pipeline_mode = #tpu.pipeline_mode<synchronous>, transform_indices = @transform_2, window_bounds = array<i64: 1, 16>}, {pipeline_mode = #tpu.pipeline_mode<synchronous>, transform_indices = @transform_3, window_bounds = array<i64: 16, 8>}, {pipeline_mode = #tpu.pipeline_mode<synchronous>, transform_indices = @transform_4, window_bounds = array<i64: 1, 8>}, {pipeline_mode = #tpu.pipeline_mode<synchronous>, transform_indices = @transform_5, window_bounds = array<i64: 8, 4>}, {pipeline_mode = #tpu.pipeline_mode<synchronous>, transform_indices = @transform_6, window_bounds = array<i64: 1, 4>}, {transform_indices = @transform_7, window_bounds = array<i64: 8, 4>}]} {
    %c0 = arith.constant 0 : index
    %c0_0 = arith.constant 0 : index
    %0 = vector.load %arg1[%c0, %c0_0] : memref<8x32xbf16, #tpu.memory_space<vmem>>, vector<8x32xbf16>
    %c0_1 = arith.constant 0 : index
    %c0_2 = arith.constant 0 : index
    %1 = vector.load %arg2[%c0_1, %c0_2] : memref<32x16xf32, #tpu.memory_space<vmem>>, vector<32x16xf32>
    %cst = arith.constant dense<0.000000e+00> : vector<8x16xf32>
    %2 = tpu.matmul %0, %1, %cst {dimension_numbers = #tpu.dot_dimension_numbers<[1], [0], [0], [1], [0, 0, 1, 1], [], []>} : vector<8x32xbf16>, vector<32x16xf32>, vector<8x16xf32> -> vector<8x16xf32>
    %c0_3 = arith.constant 0 : index
    %c0_4 = arith.constant 0 : index
    %3 = vector.load %arg3[%c0_3, %c0_4] : memref<1x16xf32, #tpu.memory_space<vmem>>, vector<1x16xf32>
    %4 = vector.broadcast %3 : vector<1x16xf32> to vector<8x16xf32>
    %5 = arith.addf %2, %4 : vector<8x16xf32>
    %cst_5 = arith.constant 0.000000e+00 : f32
    %6 = vector.broadcast %cst_5 : f32 to vector<8x16xf32>
    %7 = arith.maximumf %5, %6 : vector<8x16xf32>
    %c0_6 = arith.constant 0 : index
    %c0_7 = arith.constant 0 : index
    %8 = vector.load %arg4[%c0_6, %c0_7] : memref<16x8xf32, #tpu.memory_space<vmem>>, vector<16x8xf32>
    %cst_8 = arith.constant dense<0.000000e+00> : vector<8x8xf32>
    %9 = tpu.matmul %7, %8, %cst_8 {dimension_numbers = #tpu.dot_dimension_numbers<[1], [0], [0], [1], [0, 0, 1, 1], [], []>} : vector<8x16xf32>, vector<16x8xf32>, vector<8x8xf32> -> vector<8x8xf32>
    %c0_9 = arith.constant 0 : index
    %c0_10 = arith.constant 0 : index
    %10 = vector.load %arg5[%c0_9, %c0_10] : memref<1x8xf32, #tpu.memory_space<vmem>>, vector<1x8xf32>
    %11 = vector.broadcast %10 : vector<1x8xf32> to vector<8x8xf32>
    %12 = arith.addf %9, %11 : vector<8x8xf32>
    %cst_11 = arith.constant 0.000000e+00 : f32
    %13 = vector.broadcast %cst_11 : f32 to vector<8x8xf32>
    %14 = arith.maximumf %12, %13 : vector<8x8xf32>
    %c0_12 = arith.constant 0 : index
    %c0_13 = arith.constant 0 : index
    %15 = vector.load %arg6[%c0_12, %c0_13] : memref<8x4xf32, #tpu.memory_space<vmem>>, vector<8x4xf32>
    %cst_14 = arith.constant dense<0.000000e+00> : vector<8x4xf32>
    %16 = tpu.matmul %14, %15, %cst_14 {dimension_numbers = #tpu.dot_dimension_numbers<[1], [0], [0], [1], [0, 0, 1, 1], [], []>} : vector<8x8xf32>, vector<8x4xf32>, vector<8x4xf32> -> vector<8x4xf32>
    %c0_15 = arith.constant 0 : index
    %c0_16 = arith.constant 0 : index
    %17 = vector.load %arg7[%c0_15, %c0_16] : memref<1x4xf32, #tpu.memory_space<vmem>>, vector<1x4xf32>
    %18 = vector.broadcast %17 : vector<1x4xf32> to vector<8x4xf32>
    %19 = arith.addf %16, %18 : vector<8x4xf32>
    %cst_17 = arith.constant dense<0xFF800000> : vector<8xf32>
    %20 = vector.multi_reduction <maximumf>, %19, %cst_17 [1] : vector<8x4xf32> to vector<8xf32>
    %21 = vector.shape_cast %20 : vector<8xf32> to vector<8x1xf32>
    %22 = vector.broadcast %21 : vector<8x1xf32> to vector<8x4xf32>
    %23 = arith.subf %19, %22 : vector<8x4xf32>
    %24 = math.exp %23 : vector<8x4xf32>
    %cst_18 = arith.constant dense<0.000000e+00> : vector<8xf32>
    %25 = vector.multi_reduction <add>, %24, %cst_18 [1] : vector<8x4xf32> to vector<8xf32>
    %26 = vector.shape_cast %25 : vector<8xf32> to vector<8x1xf32>
    %27 = vector.broadcast %26 : vector<8x1xf32> to vector<8x4xf32>
    %28 = arith.divf %24, %27 : vector<8x4xf32>
    %c0_19 = arith.constant 0 : index
    %c0_20 = arith.constant 0 : index
    %29 = vector.load %arg8[%c0_19, %c0_20] : memref<8x4xf32, #tpu.memory_space<vmem>>, vector<8x4xf32>
    tpu.vector_store %arg8[%c0_19, %c0_20], %28 {strides = array<i32>} : memref<8x4xf32, #tpu.memory_space<vmem>>, vector<8x4xf32>,
    return
  }
  func.func @transform_0(%arg0: i32) -> (i32, i32) {
    %c0_i32 = arith.constant 0 : i32
    %c0_i32_0 = arith.constant 0 : i32
    return %arg0, %c0_i32 : i32, i32
  }
  func.func @transform_1(%arg0: i32) -> (i32, i32) {
    %c0_i32 = arith.constant 0 : i32
    %c0_i32_0 = arith.constant 0 : i32
    %c0_i32_1 = arith.constant 0 : i32
    return %c0_i32, %c0_i32_0 : i32, i32
  }
  func.func @transform_2(%arg0: i32) -> (i32, i32) {
    %c0_i32 = arith.constant 0 : i32
    %c0_i32_0 = arith.constant 0 : i32
    %c0_i32_1 = arith.constant 0 : i32
    return %c0_i32, %c0_i32_0 : i32, i32
  }
  func.func @transform_3(%arg0: i32) -> (i32, i32) {
    %c0_i32 = arith.constant 0 : i32
    %c0_i32_0 = arith.constant 0 : i32
    %c0_i32_1 = arith.constant 0 : i32
    return %c0_i32, %c0_i32_0 : i32, i32
  }
  func.func @transform_4(%arg0: i32) -> (i32, i32) {
    %c0_i32 = arith.constant 0 : i32
    %c0_i32_0 = arith.constant 0 : i32
    %c0_i32_1 = arith.constant 0 : i32
    return %c0_i32, %c0_i32_0 : i32, i32
  }
  func.func @transform_5(%arg0: i32) -> (i32, i32) {
    %c0_i32 = arith.constant 0 : i32
    %c0_i32_0 = arith.constant 0 : i32
    %c0_i32_1 = arith.constant 0 : i32
    return %c0_i32, %c0_i32_0 : i32, i32
  }
  func.func @transform_6(%arg0: i32) -> (i32, i32) {
    %c0_i32 = arith.constant 0 : i32
    %c0_i32_0 = arith.constant 0 : i32
    %c0_i32_1 = arith.constant 0 : i32
    return %c0_i32, %c0_i32_0 : i32, i32
  }
  func.func @transform_7(%arg0: i32) -> (i32, i32) {
    %c0_i32 = arith.constant 0 : i32
    %c0_i32_0 = arith.constant 0 : i32
    return %arg0, %c0_i32 : i32, i32
  }
}

</mosaic_0001>

<llo_original>
// kernel: tpu_custom_call.1
$region0: #{tpu_custom_call.1}
  #allocation0 [shape = 'u32[]', space=smem, size = 0x4, offset = 0x4, fixed_abs, tag = 'smem constant byte address 0x4 - core index']
  #allocation1 [shape = 'u32[144,128]{1,0:T(1,128)}', space=vmem, size = 0x12000, scoped, tag = 'internal scratch']
  %s0 = inlined_call_operand.vmem [shape: bf16[8,32], index: 0, kind: input, shape index: {}]
  %s1 = inlined_call_operand.vmem [shape: f32[32,16], index: 1, kind: input, shape index: {}]
  %s2 = inlined_call_operand.vmem [shape: f32[1,16], index: 2, kind: input, shape index: {}]
  %s3 = inlined_call_operand.vmem [shape: f32[16,8], index: 3, kind: input, shape index: {}]
  %s4 = inlined_call_operand.vmem [shape: f32[1,8], index: 4, kind: input, shape index: {}]
  %s5 = inlined_call_operand.vmem [shape: f32[8,4], index: 5, kind: input, shape index: {}]
  %s6 = inlined_call_operand.vmem [shape: f32[1,4], index: 6, kind: input, shape index: {}]
  %s7 = inlined_call_operand.vmem [shape: f32[8,4], index: 7, kind: output, shape index: {}]
  %s8 = sld [smem:[#allocation0]]
  $region38: #{tpu_custom_call.1} parent=0
    _
  %s10 = ssub.s32 1, %s8
  %s11 = scalar_select 0, %s10, %s8
  // Predicated region
  $region2: #{tpu_custom_call.1} parent=0 // pred_check
    _
  $region3: #{tpu_custom_call.1} parent=0 // pred_check_branch
    %13 = sbr.rel (0) target = $region5
  $region4: #{tpu_custom_call.1} parent=0 // pred_region
    _
  $region5: #{tpu_custom_call.1} parent=0 // pred_fallthru
    _
  // Predicated region
  $region6: #{tpu_custom_call.1} parent=0 // pred_check
    _
  $region7: #{tpu_custom_call.1} parent=0 // pred_check_branch
    %15 = sbr.rel (0) target = $region9
  $region8: #{tpu_custom_call.1} parent=0 // pred_region
    _
  $region9: #{tpu_custom_call.1} parent=0 // pred_fallthru
    _
  // Predicated region
  $region10: #{tpu_custom_call.1} parent=0 // pred_check
    _
  $region11: #{tpu_custom_call.1} parent=0 // pred_check_branch
    %17 = sbr.rel (0) target = $region13
  $region12: #{tpu_custom_call.1} parent=0 // pred_region
    _
  $region13: #{tpu_custom_call.1} parent=0 // pred_fallthru
    _
  // Predicated region
  $region14: #{tpu_custom_call.1} parent=0 // pred_check
    _
  $region15: #{tpu_custom_call.1} parent=0 // pred_check_branch
    %19 = sbr.rel (0) target = $region17
  $region16: #{tpu_custom_call.1} parent=0 // pred_region
    _
  $region17: #{tpu_custom_call.1} parent=0 // pred_fallthru
    _
  // Predicated region
  $region18: #{tpu_custom_call.1} parent=0 // pred_check
    _
  $region19: #{tpu_custom_call.1} parent=0 // pred_check_branch
    %21 = sbr.rel (0) target = $region21
  $region20: #{tpu_custom_call.1} parent=0 // pred_region
    _
  $region21: #{tpu_custom_call.1} parent=0 // pred_fallthru
    _
  // Predicated region
  $region22: #{tpu_custom_call.1} parent=0 // pred_check
    _
  $region23: #{tpu_custom_call.1} parent=0 // pred_check_branch
    %23 = sbr.rel (0) target = $region25
  $region24: #{tpu_custom_call.1} parent=0 // pred_region
    _
  $region25: #{tpu_custom_call.1} parent=0 // pred_fallthru
    _
  // Predicated region
  $region26: #{tpu_custom_call.1} parent=0 // pred_check
    _
  $region27: #{tpu_custom_call.1} parent=0 // pred_check_branch
    %25 = sbr.rel (0) target = $region29
  $region28: #{tpu_custom_call.1} parent=0 // pred_region
    _
  $region29: #{tpu_custom_call.1} parent=0 // pred_fallthru
    _
  %v27 = vld [vmem:[%s0] sm:$0xf]
  %v28 = vld [vmem:[%s1] sm:$0xff]
  %v29 = vld [vmem:[%s1 + $0x8] sm:$0xff]
  %v30 = vld [vmem:[%s1 + $0x10] sm:$0xff]
  %v31 = vld [vmem:[%s1 + $0x18] sm:$0xff]
  %v32 = vld [vmem:[%s2] sm:$0x1]
  %v34 = vlaneseq
  %v35 = vshrl.u32 %v34, 7
  %v36 = vsub.s32 0, %v35
  %v37 = vrot.slane %v32, %v36
  %vm39 = vcmask 261120
  %v41 = vsel %vm39, %v27, 0
  %43 = vmatprep.subr.mxu0 0.0
  %44 = vmatpush1.msra.mxu0 %v28
  %45 = vmatprep.subr.mxu0 0.0
  %46 = vmatpush1.msra.mxu0 %v29
  %47 = vmatprep.subr.mxu0 0.0
  %48 = vmatpush1.msra.mxu0 %v30
  %49 = vmatprep.subr.mxu0 0.0
  %50 = vmatpush1.msra.mxu0 %v31
  %51 = vmatprep.subr.mxu0 0.0
  %52 = vmatpush1.msra.mxu0 0.0
  %53 = vmatprep.subr.mxu0 0.0
  %54 = vmatpush1.msra.mxu0 0.0
  %55 = vmatprep.subr.mxu0 0.0
  %56 = vmatpush1.msra.mxu0 0.0
  %57 = vmatprep.subr.mxu0 0.0
  %58 = vmatpush1.msra.mxu0 0.0
  %59 = vmatprep.subr.mxu0 0.0
  %60 = vmatpush1.msra.mxu0 0.0
  %61 = vmatprep.subr.mxu0 0.0
  %62 = vmatpush1.msra.mxu0 0.0
  %63 = vmatprep.subr.mxu0 0.0
  %64 = vmatpush1.msra.mxu0 0.0
  %65 = vmatprep.subr.mxu0 0.0
  %66 = vmatpush1.msra.mxu0 0.0
  %67 = vmatprep.subr.mxu0 0.0
  %68 = vmatpush1.msra.mxu0 0.0
  %69 = vmatprep.subr.mxu0 0.0
  %70 = vmatpush1.msra.mxu0 0.0
  %71 = vmatprep.subr.mxu0 0.0
  %72 = vmatpush1.msra.mxu0 0.0
  %73 = vmatprep.subr.mxu0 0.0
  %74 = vmatpush1.msra.mxu0 0.0
  %75 = vmatprep.subr.mxu0 0.0
  %76 = vmatpush1.msra.mxu0 0.0
  %77 = vmatprep.subr.mxu0 0.0
  %78 = vmatpush1.msra.mxu0 0.0
  %79 = vmatprep.subr.mxu0 0.0
  %80 = vmatpush1.msra.mxu0 0.0
  %81 = vmatprep.subr.mxu0 0.0
  %82 = vmatpush1.msra.mxu0 0.0
  %83 = vmatprep.subr.mxu0 0.0
  %84 = vmatpush1.msra.mxu0 0.0
  %85 = vmatprep.subr.mxu0 0.0
  %86 = vmatpush1.msra.mxu0 0.0
  %87 = vmatprep.subr.mxu0 0.0
  %88 = vmatpush1.msra.mxu0 0.0
  %89 = vmatprep.subr.mxu0 0.0
  %90 = vmatpush1.msra.mxu0 0.0
  %91 = vmatprep.subr.mxu0 0.0
  %92 = vmatpush1.msra.mxu0 0.0
  %93 = vmatprep.subr.mxu0 0.0
  %94 = vmatpush1.msra.mxu0 0.0
  %95 = vmatprep.subr.mxu0 0.0
  %96 = vmatpush1.msra.mxu0 0.0
  %97 = vmatprep.subr.mxu0 0.0
  %98 = vmatpush1.msra.mxu0 0.0
  %99 = vmatprep.subr.mxu0 0.0
  %100 = vmatpush1.msra.mxu0 0.0
  %101 = vmatprep.subr.mxu0 0.0
  %102 = vmatpush1.msra.mxu0 0.0
  %103 = vmatprep.subr.mxu0 0.0
  %104 = vmatpush1.msra.mxu0 0.0
  %105 = vmatprep.subr.mxu0 0.0
  %106 = vmatpush1.msra.mxu0 0.0
  %107 = vmatprep.mubr.bf16.mxu0 0
  %108 = vmatmul.mubr.bf16.gmra.mrb[0].mxu0 %v41
  %v109 = vpop.f32.mrb[0].mxu0
  %v110 = vadd.f32 %v37, %v109
  %v111 = vpop.f32.mrb[0].mxu0
  %v112 = vpop.f32.mrb[0].mxu0
  %v113 = vpop.f32.mrb[0].mxu0
  %114 = vdwg.mxu0
  %v115 = vmax.f32 %v110, 0.0
  %v116 = vld [vmem:[%s3] sm:$0xff]
  %v117 = vld [vmem:[%s3 + $0x8] sm:$0xff]
  %v118 = vld [vmem:[%s4] sm:$0x1]
  %v120 = vlaneseq
  %v121 = vshrl.u32 %v120, 7
  %v122 = vsub.s32 0, %v121
  %v123 = vrot.slane %v118, %v122
  %vm125 = vcmask 130048
  %v127 = vsel %vm125, %v115, 0
  %129 = vmatprep.subr.mxu0 0.0
  %130 = vmatpush1.msra.mxu0 %v116
  %131 = vmatprep.subr.mxu0 0.0
  %132 = vmatpush1.msra.mxu0 %v117
  %133 = vmatprep.subr.mxu0 0.0
  %134 = vmatpush1.msra.mxu0 0.0
  %135 = vmatprep.subr.mxu0 0.0
  %136 = vmatpush1.msra.mxu0 0.0
  %137 = vmatprep.subr.mxu0 0.0
  %138 = vmatpush1.msra.mxu0 0.0
  %139 = vmatprep.subr.mxu0 0.0
  %140 = vmatpush1.msra.mxu0 0.0
  %141 = vmatprep.subr.mxu0 0.0
  %142 = vmatpush1.msra.mxu0 0.0
  %143 = vmatprep.subr.mxu0 0.0
  %144 = vmatpush1.msra.mxu0 0.0
  %145 = vmatprep.subr.mxu0 0.0
  %146 = vmatpush1.msra.mxu0 0.0
  %147 = vmatprep.subr.mxu0 0.0
  %148 = vmatpush1.msra.mxu0 0.0
  %149 = vmatprep.subr.mxu0 0.0
  %150 = vmatpush1.msra.mxu0 0.0
  %151 = vmatprep.subr.mxu0 0.0
  %152 = vmatpush1.msra.mxu0 0.0
  %153 = vmatprep.subr.mxu0 0.0
  %154 = vmatpush1.msra.mxu0 0.0
  %155 = vmatprep.subr.mxu0 0.0
  %156 = vmatpush1.msra.mxu0 0.0
  %157 = vmatprep.subr.mxu0 0.0
  %158 = vmatpush1.msra.mxu0 0.0
  %159 = vmatprep.subr.mxu0 0.0
  %160 = vmatpush1.msra.mxu0 0.0
  %161 = vmatprep.subr.mxu0 0.0
  %162 = vmatpush1.msra.mxu0 0.0
  %163 = vmatprep.subr.mxu0 0.0
  %164 = vmatpush1.msra.mxu0 0.0
  %165 = vmatprep.subr.mxu0 0.0
  %166 = vmatpush1.msra.mxu0 0.0
  %167 = vmatprep.subr.mxu0 0.0
  %168 = vmatpush1.msra.mxu0 0.0
  %169 = vmatprep.subr.mxu0 0.0
  %170 = vmatpush1.msra.mxu0 0.0
  %171 = vmatprep.subr.mxu0 0.0
  %172 = vmatpush1.msra.mxu0 0.0
  %173 = vmatprep.subr.mxu0 0.0
  %174 = vmatpush1.msra.mxu0 0.0
  %175 = vmatprep.subr.mxu0 0.0
  %176 = vmatpush1.msra.mxu0 0.0
  %177 = vmatprep.subr.mxu0 0.0
  %178 = vmatpush1.msra.mxu0 0.0
  %179 = vmatprep.subr.mxu0 0.0
  %180 = vmatpush1.msra.mxu0 0.0
  %181 = vmatprep.subr.mxu0 0.0
  %182 = vmatpush1.msra.mxu0 0.0
  %183 = vmatprep.subr.mxu0 0.0
  %184 = vmatpush1.msra.mxu0 0.0
  %185 = vmatprep.subr.mxu0 0.0
  %186 = vmatpush1.msra.mxu0 0.0
  %187 = vmatprep.subr.mxu0 0.0
  %188 = vmatpush1.msra.mxu0 0.0
  %189 = vmatprep.subr.mxu0 0.0
  %190 = vmatpush1.msra.mxu0 0.0
  %191 = vmatprep.subr.mxu0 0.0
  %192 = vmatpush1.msra.mxu0 0.0
  %193 = vmatprep.mubr.f32.mxu0 0.0
  %194 = vmatmul.mubr.f32.gmra.mrb[0].mxu0 %v127
  %v195 = vpop.f32.mrb[0].mxu0
  %v196 = vadd.f32 %v123, %v195
  %v197 = vpop.f32.mrb[0].mxu0
  %198 = vdwg.mxu0
  %v199 = vmax.f32 %v196, 0.0
  %v200 = vld [vmem:[%s5] sm:$0xff]
  %v201 = vld [vmem:[%s6] sm:$0x1]
  %v203 = vlaneseq
  %v204 = vshrl.u32 %v203, 7
  %v205 = vsub.s32 0, %v204
  %v206 = vrot.slane %v201, %v205
  %vm208 = vcmask 64512
  %v210 = vsel %vm208, %v199, 0
  %212 = vmatprep.subr.mxu0 0.0
  %213 = vmatpush1.msra.mxu0 %v200
  %214 = vmatprep.subr.mxu0 0.0
  %215 = vmatpush1.msra.mxu0 0.0
  %216 = vmatprep.subr.mxu0 0.0
  %217 = vmatpush1.msra.mxu0 0.0
  %218 = vmatprep.subr.mxu0 0.0
  %219 = vmatpush1.msra.mxu0 0.0
  %220 = vmatprep.subr.mxu0 0.0
  %221 = vmatpush1.msra.mxu0 0.0
  %222 = vmatprep.subr.mxu0 0.0
  %223 = vmatpush1.msra.mxu0 0.0
  %224 = vmatprep.subr.mxu0 0.0
  %225 = vmatpush1.msra.mxu0 0.0
  %226 = vmatprep.subr.mxu0 0.0
  %227 = vmatpush1.msra.mxu0 0.0
  %228 = vmatprep.subr.mxu0 0.0
  %229 = vmatpush1.msra.mxu0 0.0
  %230 = vmatprep.subr.mxu0 0.0
  %231 = vmatpush1.msra.mxu0 0.0
  %232 = vmatprep.subr.mxu0 0.0
  %233 = vmatpush1.msra.mxu0 0.0
  %234 = vmatprep.subr.mxu0 0.0
  %235 = vmatpush1.msra.mxu0 0.0
  %236 = vmatprep.subr.mxu0 0.0
  %237 = vmatpush1.msra.mxu0 0.0
  %238 = vmatprep.subr.mxu0 0.0
  %239 = vmatpush1.msra.mxu0 0.0
  %240 = vmatprep.subr.mxu0 0.0
  %241 = vmatpush1.msra.mxu0 0.0
  %242 = vmatprep.subr.mxu0 0.0
  %243 = vmatpush1.msra.mxu0 0.0
  %244 = vmatprep.subr.mxu0 0.0
  %245 = vmatpush1.msra.mxu0 0.0
  %246 = vmatprep.subr.mxu0 0.0
  %247 = vmatpush1.msra.mxu0 0.0
  %248 = vmatprep.subr.mxu0 0.0
  %249 = vmatpush1.msra.mxu0 0.0
  %250 = vmatprep.subr.mxu0 0.0
  %251 = vmatpush1.msra.mxu0 0.0
  %252 = vmatprep.subr.mxu0 0.0
  %253 = vmatpush1.msra.mxu0 0.0
  %254 = vmatprep.subr.mxu0 0.0
  %255 = vmatpush1.msra.mxu0 0.0
  %256 = vmatprep.subr.mxu0 0.0
  %257 = vmatpush1.msra.mxu0 0.0
  %258 = vmatprep.subr.mxu0 0.0
  %259 = vmatpush1.msra.mxu0 0.0
  %260 = vmatprep.subr.mxu0 0.0
  %261 = vmatpush1.msra.mxu0 0.0
  %262 = vmatprep.subr.mxu0 0.0
  %263 = vmatpush1.msra.mxu0 0.0
  %264 = vmatprep.subr.mxu0 0.0
  %265 = vmatpush1.msra.mxu0 0.0
  %266 = vmatprep.subr.mxu0 0.0
  %267 = vmatpush1.msra.mxu0 0.0
  %268 = vmatprep.subr.mxu0 0.0
  %269 = vmatpush1.msra.mxu0 0.0
  %270 = vmatprep.subr.mxu0 0.0
  %271 = vmatpush1.msra.mxu0 0.0
  %272 = vmatprep.subr.mxu0 0.0
  %273 = vmatpush1.msra.mxu0 0.0
  %274 = vmatprep.subr.mxu0 0.0
  %275 = vmatpush1.msra.mxu0 0.0
  %276 = vmatprep.mubr.f32.mxu0 0.0
  %277 = vmatmul.mubr.f32.gmra.mrb[0].mxu0 %v210
  %v278 = vpop.f32.mrb[0].mxu0
  %v279 = vadd.f32 %v206, %v278
  %v280 = vpop.f32.mrb[0].mxu0
  %281 = vdwg.mxu0
  %vm282 = vcmask 31744
  %v283 = vsel %vm282, %v279, -inf
  %284 = vmax.xlane.f32.xlu0 %v283
  %v285 = vpop.xlane.xlu0 %284
  %v286 = vsub.f32 %v279, %v285
  %v287 = vmul.f32 %v286, 1.442695
  %v288 = vpow.pop %v287
  %v289 = vsel %vm282, %v288, 0.0
  %290 = vadd.xlane.f32.xlu0 %v289
  %v291 = vpop.xlane.xlu0 %290
  %v292 = vrcp.pop %v291
  %v293 = vmul.f32 %v288, %v292
  %294 = vst.msk [vmem:[%s7] sm:$0xff] %vm282, %v293
  // Predicated region
  $region30: #{tpu_custom_call.1} parent=0 // pred_check
    _
  $region31: #{tpu_custom_call.1} parent=0 // pred_check_branch
    %296 = sbr.rel (0) target = $region33
  $region32: #{tpu_custom_call.1} parent=0 // pred_region
    _
  $region33: #{tpu_custom_call.1} parent=0 // pred_fallthru
    _
  // Predicated region
  $region34: #{tpu_custom_call.1} parent=0 // pred_check
    _
  $region35: #{tpu_custom_call.1} parent=0 // pred_check_branch
    %298 = sbr.rel (0) target = $region37
  $region36: #{tpu_custom_call.1} parent=0 // pred_region
    _
  $region37: #{tpu_custom_call.1} parent=0 // pred_fallthru
    _

</llo_original>
